<compile_context>
chip_gen: v7x
topology: tpu7x:2x2x1
jax: 0.10.0
libtpu: 0.0.40
codegen_flags: <defaults>
</compile_context>

<pallas_src>
import jax
import jax.numpy as jnp
from jax.experimental import pallas as pl
from jax.experimental.pallas import tpu as pltpu

FEAT_DIM = 64
NUM_CLASSES = 10
NUM_LOROT = 16
NUM_FLIPS = 2
NUM_SC = 6
NUM_GATING = 3

HEAD_NAMES = ("cls", "lorot", "flip", "sc", "gating")
HEAD_SIZES = (NUM_CLASSES, NUM_LOROT, NUM_FLIPS, NUM_SC, NUM_GATING)
# 8-lane-aligned packing offsets inside the 128-wide fused output.
HEAD_OFFSETS = (0, 16, 32, 40, 48)
PAD_OUT = 128                 # lane-dense padded output width
ROW_TILE = 512                # batch tile for large-B pipelining


def _round_up(x, m):
    return ((x + m - 1) // m) * m


def _fused_heads_kernel(feat_ref, w_ref, b_ref, out_ref):
    """One row-tile of the fused matmul: (TB,64)bf16 @ (64,128)bf16 -> f32 + bias."""
    out_ref[...] = (
        jnp.dot(feat_ref[...], w_ref[...], preferred_element_type=jnp.float32)
        + b_ref[...]
    )


def moe1_heads_fused(feat, w_fused, b_fused):
    """Fused five-head matmul.

    feat: (B, 64) any float dtype.  Returns (B, 128) float32 slab with heads
    packed at HEAD_OFFSETS.  Batch is padded to a multiple of 8 (and of the
    row tile when B is large) for unmasked full-vreg stores; pad rows are
    sliced off before returning.
    """
    B = feat.shape[0]
    feat = feat.astype(jnp.bfloat16)

    # Pick tile / padded batch.
    if B < ROW_TILE:
        tb = max(8, _round_up(B, 8))
        b_pad = tb
    else:
        tb = ROW_TILE
        b_pad = _round_up(B, tb)
    if b_pad != B:
        feat = jnp.pad(feat, ((0, b_pad - B), (0, 0)))

    grid = (b_pad // tb,)

    cost = pl.CostEstimate(
        flops=2 * b_pad * FEAT_DIM * PAD_OUT,
        transcendentals=0,
        bytes_accessed=(b_pad * FEAT_DIM * 2          # feat in (bf16)
                        + FEAT_DIM * PAD_OUT * 2      # fused weight in (bf16)
                        + PAD_OUT * 4                 # fused bias in (f32)
                        + b_pad * PAD_OUT * 4),       # fused output out (f32)
    )

    out = pl.pallas_call(
        _fused_heads_kernel,
        out_shape=jax.ShapeDtypeStruct((b_pad, PAD_OUT), jnp.float32),
        grid_spec=pltpu.PrefetchScalarGridSpec(
            num_scalar_prefetch=0,
            grid=grid,
            in_specs=[
                pl.BlockSpec((tb, FEAT_DIM), lambda i: (i, 0)),
                pl.BlockSpec((FEAT_DIM, PAD_OUT), lambda i: (0, 0)),
                pl.BlockSpec((1, PAD_OUT), lambda i: (0, 0)),
            ],
            out_specs=pl.BlockSpec((tb, PAD_OUT), lambda i: (i, 0)),
        ),
        compiler_params=pltpu.CompilerParams(
            dimension_semantics=("parallel",),
        ),
        cost_estimate=cost,
    )(feat, w_fused, b_fused)

    return out[:B] if b_pad != B else out


def fuse_head_params(params):
    """One-time prep: pack the five torch-style (out,in) weights into a single
    (64, 128) bf16 fused weight and a (1, 128) f32 fused bias, with each head
    starting at an 8-lane-aligned column offset."""
    w_fused = jnp.zeros((FEAT_DIM, PAD_OUT), jnp.float32)
    b_fused = jnp.zeros((1, PAD_OUT), jnp.float32)
    for name, off, n in zip(HEAD_NAMES, HEAD_OFFSETS, HEAD_SIZES):
        w = params["w_" + name].astype(jnp.float32)   # (n, 64) torch layout
        b = params["b_" + name].astype(jnp.float32)   # (n,)
        w_fused = w_fused.at[:, off:off + n].set(w.T)
        b_fused = b_fused.at[:, off:off + n].set(b)
    return w_fused.astype(jnp.bfloat16), b_fused


def _heads_fused_xla(feat, w_fused, b_fused):
    """Plain-XLA path for tiny batches (skips custom-call launch overhead)."""
    return jnp.dot(feat.astype(jnp.bfloat16), w_fused,
                   preferred_element_type=jnp.float32) + b_fused


def moe1_forward(feat, fused_params, training=True, ssl_task=True,
                 use_pallas=True):
    """Mirrors Moe1.forward after the backbone:
    (cls, lorot, flip, sc, gating) when training & ssl_task, else cls only."""
    w_fused, b_fused = fused_params
    if use_pallas:
        out = moe1_heads_fused(feat, w_fused, b_fused)        # (B, 128)
    else:
        out = _heads_fused_xla(feat, w_fused, b_fused)
    # Lane-aligned slices (offsets are multiples of 8).
    cls = out[:, HEAD_OFFSETS[0]:HEAD_OFFSETS[0] + NUM_CLASSES]
    if training and ssl_task:
        lorot = out[:, HEAD_OFFSETS[1]:HEAD_OFFSETS[1] + NUM_LOROT]
        flip = out[:, HEAD_OFFSETS[2]:HEAD_OFFSETS[2] + NUM_FLIPS]
        sc = out[:, HEAD_OFFSETS[3]:HEAD_OFFSETS[3] + NUM_SC]
        gating = out[:, HEAD_OFFSETS[4]:HEAD_OFFSETS[4] + NUM_GATING]
        return cls, lorot, flip, sc, gating
    return cls


def init_params(key):
    # torch.nn.Linear default init: U(-1/sqrt(fan_in), 1/sqrt(fan_in)),
    # weight stored PyTorch-style as (out_features, in_features).
    keys = jax.random.split(key, 10)
    bound = 1.0 / (FEAT_DIM ** 0.5)

    def w(k, n_out):
        return jax.random.uniform(k, (n_out, FEAT_DIM), jnp.float32, -bound, bound)

    def b(k, n_out):
        return jax.random.uniform(k, (n_out,), jnp.float32, -bound, bound)

    return {
        "w_cls": w(keys[0], NUM_CLASSES),   "b_cls": b(keys[1], NUM_CLASSES),
        "w_lorot": w(keys[2], NUM_LOROT),   "b_lorot": b(keys[3], NUM_LOROT),
        "w_flip": w(keys[4], NUM_FLIPS),    "b_flip": b(keys[5], NUM_FLIPS),
        "w_sc": w(keys[6], NUM_SC),         "b_sc": b(keys[7], NUM_SC),
        "w_gating": w(keys[8], NUM_GATING), "b_gating": b(keys[9], NUM_GATING),
    }


def _reference_heads(feat, params, bf16_match=False):
    """Pure-JAX reference.  bf16_match=True mimics the bf16 operand cast."""
    outs = []
    f = feat
    if bf16_match:
        f = feat.astype(jnp.bfloat16).astype(jnp.float32)
    for name in HEAD_NAMES:
        w = params["w_" + name].astype(jnp.float32)
        b = params["b_" + name].astype(jnp.float32)
        if bf16_match:
            w = w.astype(jnp.bfloat16).astype(jnp.float32)
        outs.append(f @ w.T + b)
    return tuple(outs)


if __name__ == "__main__":
    key = jax.random.PRNGKey(0)
    k_params, k_feat, k_feat_big = jax.random.split(key, 3)

    params = init_params(k_params)
    fused = fuse_head_params(params)   # done once, outside the forward pass

    # ---- small training batch (B=2, padded to 8 internally) ----
    B = 2
    feat = jax.random.normal(k_feat, (B, FEAT_DIM), dtype=jnp.float32)

    cls_l, lorot_l, flip_l, sc_l, gating_l = moe1_forward(
        feat, fused, training=True, ssl_task=True)
    outs = [jax.block_until_ready(o)
            for o in (cls_l, lorot_l, flip_l, sc_l, gating_l)]
    cls_l, lorot_l, flip_l, sc_l, gating_l = outs

    # eval / non-ssl path: classifier only
    cls_only = jax.block_until_ready(
        moe1_forward(feat, fused, training=False, ssl_task=True))

    assert cls_l.shape == (B, NUM_CLASSES)
    assert lorot_l.shape == (B, NUM_LOROT)
    assert flip_l.shape == (B, NUM_FLIPS)
    assert sc_l.shape == (B, NUM_SC)
    assert gating_l.shape == (B, NUM_GATING)
    assert cls_only.shape == (B, NUM_CLASSES)

    # bf16-operand-matched reference: tight tolerance.
    refs_bf16 = _reference_heads(feat, params, bf16_match=True)
    for got, ref in zip(outs, refs_bf16):
        assert jnp.allclose(got, ref, atol=1e-4, rtol=1e-4)
    assert jnp.allclose(cls_only, refs_bf16[0], atol=1e-4, rtol=1e-4)

    # pure-f32 torch-semantics reference: loose tolerance (bf16 operands).
    refs_f32 = _reference_heads(feat, params, bf16_match=False)
    for got, ref in zip(outs, refs_f32):
        assert jnp.allclose(got, ref, atol=5e-2, rtol=5e-2)

    # ---- larger ragged batch to exercise the batch grid + padding path ----
    B2 = 1030   # pads to 1536 -> grid=(3,) row tiles of 512
    feat_big = jax.random.normal(k_feat_big, (B2, FEAT_DIM), dtype=jnp.float32)
    cls_b = jax.block_until_ready(
        moe1_forward(feat_big, fused, training=False, ssl_task=True))
    assert cls_b.shape == (B2, NUM_CLASSES)
    ref_cls_b = (feat_big.astype(jnp.bfloat16).astype(jnp.float32)
                 @ params["w_cls"].astype(jnp.bfloat16).astype(jnp.float32).T
                 + params["b_cls"])
    assert jnp.allclose(cls_b, ref_cls_b, atol=1e-4, rtol=1e-4)

    print("KERNEL_OK")
</pallas_src>

<mosaic_0001>
module attributes {stable_mosaic.version = 11 : i64} {
  func.func @_fused_heads_kernel(%arg0: i32, %arg1: memref<8x64xbf16, #tpu.memory_space<vmem>>, %arg2: memref<64x128xbf16, #tpu.memory_space<vmem>>, %arg3: memref<1x128xf32, #tpu.memory_space<vmem>>, %arg4: memref<8x128xf32, #tpu.memory_space<vmem>>) attributes {dimension_semantics = [#tpu.dimension_semantics<parallel>], iteration_bounds = array<i64: 1>, scalar_prefetch = 0 : i64, scratch_operands = 0 : i64, tpu.core_type = #tpu.core_type<tc>, window_params = [{transform_indices = @transform_0, window_bounds = array<i64: 8, 64>}, {pipeline_mode = #tpu.pipeline_mode<synchronous>, transform_indices = @transform_1, window_bounds = array<i64: 64, 128>}, {pipeline_mode = #tpu.pipeline_mode<synchronous>, transform_indices = @transform_2, window_bounds = array<i64: 1, 128>}, {transform_indices = @transform_3, window_bounds = array<i64: 8, 128>}]} {
    %c0 = arith.constant 0 : index
    %c0_0 = arith.constant 0 : index
    %0 = vector.load %arg1[%c0, %c0_0] : memref<8x64xbf16, #tpu.memory_space<vmem>>, vector<8x64xbf16>
    %c0_1 = arith.constant 0 : index
    %c0_2 = arith.constant 0 : index
    %1 = vector.load %arg2[%c0_1, %c0_2] : memref<64x128xbf16, #tpu.memory_space<vmem>>, vector<64x128xbf16>
    %cst = arith.constant dense<0.000000e+00> : vector<8x128xf32>
    %2 = tpu.matmul %0, %1, %cst {dimension_numbers = #tpu.dot_dimension_numbers<[1], [0], [0], [1], [0, 0, 1, 1], [], []>} : vector<8x64xbf16>, vector<64x128xbf16>, vector<8x128xf32> -> vector<8x128xf32>
    %c0_3 = arith.constant 0 : index
    %c0_4 = arith.constant 0 : index
    %3 = vector.load %arg3[%c0_3, %c0_4] : memref<1x128xf32, #tpu.memory_space<vmem>>, vector<1x128xf32>
    %4 = vector.broadcast %3 : vector<1x128xf32> to vector<8x128xf32>
    %5 = arith.addf %2, %4 : vector<8x128xf32>
    %c0_5 = arith.constant 0 : index
    %c0_6 = arith.constant 0 : index
    %6 = vector.load %arg4[%c0_5, %c0_6] : memref<8x128xf32, #tpu.memory_space<vmem>>, vector<8x128xf32>
    tpu.vector_store %arg4[%c0_5, %c0_6], %5 {strides = array<i32>} : memref<8x128xf32, #tpu.memory_space<vmem>>, vector<8x128xf32>,
    return
  }
  func.func @transform_0(%arg0: i32) -> (i32, i32) {
    %c0_i32 = arith.constant 0 : i32
    %c0_i32_0 = arith.constant 0 : i32
    return %arg0, %c0_i32 : i32, i32
  }
  func.func @transform_1(%arg0: i32) -> (i32, i32) {
    %c0_i32 = arith.constant 0 : i32
    %c0_i32_0 = arith.constant 0 : i32
    %c0_i32_1 = arith.constant 0 : i32
    return %c0_i32, %c0_i32_0 : i32, i32
  }
  func.func @transform_2(%arg0: i32) -> (i32, i32) {
    %c0_i32 = arith.constant 0 : i32
    %c0_i32_0 = arith.constant 0 : i32
    %c0_i32_1 = arith.constant 0 : i32
    return %c0_i32, %c0_i32_0 : i32, i32
  }
  func.func @transform_3(%arg0: i32) -> (i32, i32) {
    %c0_i32 = arith.constant 0 : i32
    %c0_i32_0 = arith.constant 0 : i32
    return %arg0, %c0_i32 : i32, i32
  }
}

</mosaic_0001>

<llo_original>
// kernel: tpu_custom_call.1
$region0: #{tpu_custom_call.1}
  #allocation0 [shape = 'u32[]', space=smem, size = 0x4, offset = 0x4, fixed_abs, tag = 'smem constant byte address 0x4 - core index']
  #allocation1 [shape = 'u32[144,128]{1,0:T(1,128)}', space=vmem, size = 0x12000, scoped, tag = 'internal scratch']
  %s0 = inlined_call_operand.hbm [shape: bf16[8,64], index: 0, kind: input, shape index: {}]
  %s1 = inlined_call_operand.hbm [shape: bf16[64,128], index: 1, kind: input, shape index: {}]
  %s2 = inlined_call_operand.vmem [shape: f32[1,128], index: 2, kind: input, shape index: {}]
  %s3 = inlined_call_operand.hbm [shape: f32[8,128], index: 3, kind: output, shape index: {}]
  %s4 = sld [smem:[#allocation0]]
  $region30: #{tpu_custom_call.1} parent=0
    _
  %s6 = ssub.s32 1, %s4
  %s7 = scalar_select 0, %s6, %s4
  $region1: #{tpu_custom_call.1} parent=0
    #allocation2 [shape = 'u8[2048]{0}', space=vmem, size = 0x800, scoped, tag = 'input window, operand 0, single buffered']
    #allocation3 [shape = 's32[1]{0}', space=sflag, size = 0x4, scoped, tag = 'scoped memory for tpu_custom_call.1']
    #allocation4 [shape = 's32[1]{0}', space=sflag, size = 0x4, scoped, tag = 'scoped memory for tpu_custom_call.1']
    #allocation5 [shape = 'u8[16384]{0}', space=vmem, size = 0x4000, scoped, tag = 'input window, operand 1, single buffered']
    #allocation6 [shape = 's32[1]{0}', space=sflag, size = 0x4, scoped, tag = 'scoped memory for tpu_custom_call.1']
    #allocation7 [shape = 'u8[4096]{0}', space=vmem, size = 0x1000, scoped, tag = 'output window, operand 0, single buffered']
    %8 = vsyncpa [#allocation3], 0
    %9 = vsyncpa [#allocation6], 0
    %10 = vsyncpa [#allocation4], 0
    // Predicated region
    $region2: #{tpu_custom_call.1} parent=1 // pred_check
      _
    $region3: #{tpu_custom_call.1} parent=1 // pred_check_branch
      %12 = sbr.rel (0) target = $region5
    $region4: #{tpu_custom_call.1} parent=1 // pred_region
      %s14 = ssub.s32 64, 64
      %15 = vsyncadd [#allocation3], %s14
      %s17 = sshll.u32 [#allocation2], 4
      %s18 = int_to_ptr.vmem [resolvable:$true] %s17
      %20 = dma.hbm_to_vmem [thread:$0]  %s0, 64, %s18, [#allocation3]
    $region5: #{tpu_custom_call.1} parent=1 // pred_fallthru
      _
    // Predicated region
    $region6: #{tpu_custom_call.1} parent=1 // pred_check
      _
    $region7: #{tpu_custom_call.1} parent=1 // pred_check_branch
      %22 = sbr.rel (0) target = $region9
    $region8: #{tpu_custom_call.1} parent=1 // pred_region
      %s24 = ssub.s32 512, 512
      %25 = vsyncadd [#allocation6], %s24
      %s26 = sshll.u32 [#allocation5], 4
      %s27 = int_to_ptr.vmem [resolvable:$true] %s26
      %32 = dma.hbm_to_vmem [thread:$0]  %s1, 512, %s27, [#allocation6], 64, 64, 4
    $region9: #{tpu_custom_call.1} parent=1 // pred_fallthru
      _
    // Predicated region
    $region10: #{tpu_custom_call.1} parent=1 // pred_check
      _
    $region11: #{tpu_custom_call.1} parent=1 // pred_check_branch
      %34 = sbr.rel (0) target = $region13
    $region12: #{tpu_custom_call.1} parent=1 // pred_region
      _
    $region13: #{tpu_custom_call.1} parent=1 // pred_fallthru
      _
    // Predicated region
    $region14: #{tpu_custom_call.1} parent=1 // pred_check
      _
    $region15: #{tpu_custom_call.1} parent=1 // pred_check_branch
      %36 = sbr.rel (0) target = $region17
    $region16: #{tpu_custom_call.1} parent=1 // pred_region
      %37 = dma.done [#allocation3], 64
    $region17: #{tpu_custom_call.1} parent=1 // pred_fallthru
      _
    // Predicated region
    $region18: #{tpu_custom_call.1} parent=1 // pred_check
      _
    $region19: #{tpu_custom_call.1} parent=1 // pred_check_branch
      %39 = sbr.rel (0) target = $region21
    $region20: #{tpu_custom_call.1} parent=1 // pred_region
      %40 = dma.done [#allocation6], 512
    $region21: #{tpu_custom_call.1} parent=1 // pred_fallthru
      _
    %v42 = vld [vmem:[#allocation2] sm:$0xf]
    %v43 = vld [vmem:[#allocation5] sm:$0xf]
    %v44 = vld [vmem:[#allocation5 + $0x4] sm:$0xf]
    %v45 = vld [vmem:[#allocation5 + $0x8] sm:$0xf]
    %v46 = vld [vmem:[#allocation5 + $0xc] sm:$0xf]
    %v47 = vld [vmem:[#allocation5 + $0x10] sm:$0xf]
    %v48 = vld [vmem:[#allocation5 + $0x14] sm:$0xf]
    %v49 = vld [vmem:[#allocation5 + $0x18] sm:$0xf]
    %v50 = vld [vmem:[#allocation5 + $0x1c] sm:$0xf]
    %v51 = vld [vmem:[%s2] sm:$0x1]
    %v53 = vlaneseq
    %v54 = vshrl.u32 %v53, 7
    %v55 = vsub.s32 0, %v54
    %v56 = vrot.slane %v51, %v55
    %v66 = vunpack.c.l.b16 %v43
    %v67 = vunpack.c.l.b16 %v44
    %v68 = vunpack.c.l.b16 %v45
    %v69 = vunpack.c.l.b16 %v46
    %v70 = vunpack.c.l.b16 %v47
    %v71 = vunpack.c.l.b16 %v48
    %v72 = vunpack.c.l.b16 %v49
    %v73 = vunpack.c.l.b16 %v50
    %v74 = vpack.c.b16 %v67, %v66
    %v75 = vpack.c.b16 %v69, %v68
    %v76 = vpack.c.b16 %v71, %v70
    %v77 = vpack.c.b16 %v73, %v72
    %vm82 = vcmask 523264
    %v84 = vsel %vm82, %v42, 0
    %86 = vmatprep.subr.bf16.mxu0 0
    %87 = vmatpush1.bf16.msra.mxu0 %v74
    %88 = vmatprep.subr.bf16.mxu0 0
    %89 = vmatpush1.bf16.msra.mxu0 %v75
    %90 = vmatprep.subr.bf16.mxu0 0
    %91 = vmatpush1.bf16.msra.mxu0 %v76
    %92 = vmatprep.subr.bf16.mxu0 0
    %93 = vmatpush1.bf16.msra.mxu0 %v77
    %94 = vmatprep.subr.bf16.mxu0 0
    %95 = vmatpush1.bf16.msra.mxu0 0
    %96 = vmatprep.subr.bf16.mxu0 0
    %97 = vmatpush1.bf16.msra.mxu0 0
    %98 = vmatprep.subr.bf16.mxu0 0
    %99 = vmatpush1.bf16.msra.mxu0 0
    %100 = vmatprep.subr.bf16.mxu0 0
    %101 = vmatpush1.bf16.msra.mxu0 0
    %102 = vmatprep.subr.bf16.mxu0 0
    %103 = vmatpush1.bf16.msra.mxu0 0
    %104 = vmatprep.subr.bf16.mxu0 0
    %105 = vmatpush1.bf16.msra.mxu0 0
    %106 = vmatprep.subr.bf16.mxu0 0
    %107 = vmatpush1.bf16.msra.mxu0 0
    %108 = vmatprep.subr.bf16.mxu0 0
    %109 = vmatpush1.bf16.msra.mxu0 0
    %110 = vmatprep.subr.bf16.mxu0 0
    %111 = vmatpush1.bf16.msra.mxu0 0
    %112 = vmatprep.subr.bf16.mxu0 0
    %113 = vmatpush1.bf16.msra.mxu0 0
    %114 = vmatprep.subr.bf16.mxu0 0
    %115 = vmatpush1.bf16.msra.mxu0 0
    %116 = vmatprep.subr.bf16.mxu0 0
    %117 = vmatpush1.bf16.msra.mxu0 0
    %118 = vmatprep.mubr.bf16.mxu0 0
    %119 = vmatmul.mubr.bf16.gmra.mrb[0].mxu0 %v84
    %v120 = vpop.f32.mrb[0].mxu0
    %v121 = vadd.f32 %v56, %v120
    %v122 = vpop.f32.mrb[0].mxu0
    %v123 = vpop.f32.mrb[0].mxu0
    %v124 = vpop.f32.mrb[0].mxu0
    %125 = vdwg.mxu0
    %126 = vst [vmem:[#allocation7] sm:$0xff] %v121
    // Predicated region
    $region22: #{tpu_custom_call.1} parent=1 // pred_check
      _
    $region23: #{tpu_custom_call.1} parent=1 // pred_check_branch
      %128 = sbr.rel (0) target = $region25
    $region24: #{tpu_custom_call.1} parent=1 // pred_region
      %s130 = ssub.s32 128, 128
      %131 = vsyncadd [#allocation4], %s130
      %s133 = sshll.u32 [#allocation7], 4
      %s134 = int_to_ptr.vmem [resolvable:$true] %s133
      %136 = dma.vmem_to_hbm [thread:$0]  %s134, 128, %s3, [#allocation4]
    $region25: #{tpu_custom_call.1} parent=1 // pred_fallthru
      _
    // Predicated region
    $region26: #{tpu_custom_call.1} parent=1 // pred_check
      _
    $region27: #{tpu_custom_call.1} parent=1 // pred_check_branch
      %138 = sbr.rel (0) target = $region29
    $region28: #{tpu_custom_call.1} parent=1 // pred_region
      %139 = dma.done [#allocation4], 128
    $region29: #{tpu_custom_call.1} parent=1 // pred_fallthru
      _
    %140 = vsyncpa [#allocation3], 1
    %141 = vsyncpa [#allocation6], 1
    %142 = vsyncpa [#allocation4], 1

</llo_original>
